<compile_context>
chip_gen: v7x
topology: tpu7x:2x2x1
jax: 0.10.0
libtpu: 0.0.40
codegen_flags: <defaults>
</compile_context>

<pallas_src>
import functools

import jax
import jax.numpy as jnp
from jax import lax
from jax.experimental import pallas as pl
from jax.experimental.pallas import tpu as pltpu

EPS = 1e-5  # PyTorch BatchNorm2d default eps


# ---------------------------------------------------------------------------
# Fused stage kernel: [prev-BN affine] -> ReLU -> halo pad -> depthwise KxK
# (dilated) -> 1x1 conv -> per-image BN partial sums.  One image / grid step.
# Collapsed layout: last axis of every block is W*C (lane axis).
# ---------------------------------------------------------------------------
def _stage_kernel(x_ref, pre_ref, wdw_ref, wmix_ref, y_ref, stats_ref,
                  xp_ref, accp_ref, *, K, pad, dil, Cin, same_c):
    H, WC = x_ref.shape[1], x_ref.shape[2]
    Hp, WpC = xp_ref.shape
    Ho1, WoCo = y_ref.shape[1], y_ref.shape[2]
    Wo1Ci = wdw_ref.shape[1]
    Wacc = accp_ref.shape[1]
    padC = pad * Cin

    # ---- zero only the halo (interior is fully overwritten below) ----------
    if pad > 0:
        xp_ref[0:pad, :] = jnp.zeros((pad, WpC), jnp.float32)
        xp_ref[pad + H:Hp, :] = jnp.zeros((Hp - pad - H, WpC), jnp.float32)
        xp_ref[pad:pad + H, 0:padC] = jnp.zeros((H, padC), jnp.float32)
        xp_ref[pad:pad + H, padC + WC:WpC] = jnp.zeros(
            (H, WpC - padC - WC), jnp.float32)

    # ---- folded previous-BN affine + ReLU, written into the padded slab ----
    xin = jnp.maximum(x_ref[0] * pre_ref[0:1, :] + pre_ref[1:2, :], 0.0)
    xp_ref[pad:pad + H, padC:padC + WC] = xin

    # ---- depthwise KxK (dilated) conv, stride-1 -----------------------------
    # kh -> sublane row offset, kw -> static lane offset (in-register lane
    # rotate); per-tap weights pre-tiled along the W*C lanes host-side.
    acc = jnp.zeros((Ho1, Wo1Ci), jnp.float32)
    t = 0
    for kh in range(K):
        r0 = kh * dil
        for kw in range(K):
            c0 = kw * dil * Cin
            patch = xp_ref[r0:r0 + Ho1, c0:c0 + Wo1Ci]
            acc = acc + patch * wdw_ref[t:t + 1, :]
            t += 1

    # ---- 1x1 conv ------------------------------------------------------------
    if same_c:
        # Exact-f32 VPU path (Cin == Cout, the only valid module config):
        # channel mixing as Cin pairs of lane-shifted FMAs with pre-masked,
        # pre-tiled weights.  acc sits in a lane-padded scratch so every shift
        # is a static, in-bounds ref read.
        accp_ref[:, 0:Cin] = jnp.zeros((Ho1, Cin), jnp.float32)
        accp_ref[:, Cin:Cin + Wo1Ci] = acc
        accp_ref[:, Cin + Wo1Ci:Wacc] = jnp.zeros((Ho1, Cin), jnp.float32)
        y = jnp.zeros((Ho1, WoCo), jnp.float32)
        for d in range(Cin):
            plus = accp_ref[:, Cin + d:Cin + d + Wo1Ci]
            minus = accp_ref[:, d:d + Wo1Ci]
            y = (y + plus * wmix_ref[d:d + 1, :]
                   + minus * wmix_ref[Cin + d:Cin + d + 1, :])
    else:
        # Generic fallback: one block-diagonal kron(I_Wo, Wpw) MXU matmul.
        y = jnp.dot(acc, wmix_ref[...], preferred_element_type=jnp.float32)
    y_ref[0] = y

    # ---- single-pass BatchNorm partial sums (per lane; W-fold done outside) -
    stats_ref[0, 0:1, :] = jnp.sum(y, axis=0, keepdims=True)
    stats_ref[0, 1:2, :] = jnp.sum(y * y, axis=0, keepdims=True)


def fused_stage(x_flat, pre_scale, pre_shift, w_dw, w_pw, *, pad, dil):
    """One stage on the collapsed layout.  x_flat: (N, H, W*Cin) f32,
    w_dw: (K, K, Cin), w_pw: (Cin, Cout).  Returns the stride-1 output
    (N, Ho1, Wo1*Cout) and per-image BN partial sums (N, 2, Wo1*Cout)."""
    N, H, WC = x_flat.shape
    Cin = int(pre_scale.shape[0])
    Cout = int(w_pw.shape[1])
    W = WC // Cin
    K = int(w_dw.shape[0])
    Hp, Wp = H + 2 * pad, W + 2 * pad
    Ho1 = Hp - dil * (K - 1)
    Wo1 = Wp - dil * (K - 1)
    Wo1Ci, Wo1Co = Wo1 * Cin, Wo1 * Cout

    # Host-side pre-tiling to the collapsed lane layout (all tiny).
    pre = jnp.stack([jnp.tile(pre_scale.astype(jnp.float32), W),
                     jnp.tile(pre_shift.astype(jnp.float32), W)])   # (2, W*Cin)
    wdw = jnp.broadcast_to(w_dw.astype(jnp.float32).reshape(K * K, 1, Cin),
                           (K * K, Wo1, Cin)).reshape(K * K, Wo1Ci)

    same_c = (Cin == Cout)
    if same_c:
        co = jnp.arange(Cout)
        wdiag = jnp.stack([w_pw[(co + d) % Cin, co] for d in range(Cin)])
        msk = jnp.stack([(co < (Cin - d)).astype(jnp.float32)
                         for d in range(Cin)])
        wmix = jnp.concatenate(
            [jnp.tile(wdiag * msk, (1, Wo1)),
             jnp.tile(wdiag * (1.0 - msk), (1, Wo1))],
            axis=0).astype(jnp.float32)                     # (2*Cin, Wo1*Cout)
        wmix_shape = (2 * Cin, Wo1Co)
    else:
        wmix = jnp.kron(jnp.eye(Wo1, dtype=jnp.float32),
                        w_pw.astype(jnp.float32))           # (Wo1*Cin, Wo1*Cout)
        wmix_shape = (Wo1Ci, Wo1Co)

    kern = functools.partial(_stage_kernel, K=K, pad=pad, dil=dil,
                             Cin=Cin, same_c=same_c)
    flops = int(2 * N * Ho1 * Wo1 * Cin * (K * K + Cout))
    bytes_acc = int(4 * (N * H * WC + N * Ho1 * Wo1Co + N * 2 * Wo1Co
                         + pre.size + wdw.size + wmix.size))

    y, stats = pl.pallas_call(
        kern,
        out_shape=(jax.ShapeDtypeStruct((N, Ho1, Wo1Co), jnp.float32),
                   jax.ShapeDtypeStruct((N, 2, Wo1Co), jnp.float32)),
        grid=(N,),
        in_specs=[
            pl.BlockSpec((1, H, WC), lambda n: (n, 0, 0)),
            pl.BlockSpec((2, WC), lambda n: (0, 0)),
            pl.BlockSpec((K * K, Wo1Ci), lambda n: (0, 0)),
            pl.BlockSpec(wmix_shape, lambda n: (0, 0)),
        ],
        out_specs=(
            pl.BlockSpec((1, Ho1, Wo1Co), lambda n: (n, 0, 0)),
            pl.BlockSpec((1, 2, Wo1Co), lambda n: (n, 0, 0)),
        ),
        scratch_shapes=[
            pltpu.VMEM((Hp, Wp * Cin), jnp.float32),           # padded slab
            pltpu.VMEM((Ho1, Wo1Ci + 2 * Cin), jnp.float32),   # lane-padded acc
        ],
        compiler_params=pltpu.CompilerParams(
            dimension_semantics=("parallel",)),
        cost_estimate=pl.CostEstimate(flops=flops, transcendentals=0,
                                      bytes_accessed=bytes_acc),
    )(x_flat, pre, wdw, wmix)
    return y, stats


def run_stage(x_flat, pre_scale, pre_shift, w_dw, w_pw, *, pad, dil, stride):
    """Stage wrapper: handles stride by subsampling the stride-1 kernel output
    and returns (y_flat, bn_sums(2,Cout), count, Ho, Wo)."""
    N = x_flat.shape[0]
    Cout = int(w_pw.shape[1])
    y1, stats = fused_stage(x_flat, pre_scale, pre_shift, w_dw, w_pw,
                            pad=pad, dil=dil)
    Ho1, Wo1Co = int(y1.shape[1]), int(y1.shape[2])
    Wo1 = Wo1Co // Cout
    if stride == 1:
        tot = jnp.sum(stats, axis=0).reshape(2, Wo1, Cout).sum(axis=1)
        return y1, tot, N * Ho1 * Wo1, Ho1, Wo1
    y4 = y1.reshape(N, Ho1, Wo1, Cout)[:, ::stride, ::stride, :]
    Ho, Wo = int(y4.shape[1]), int(y4.shape[2])
    tot = jnp.stack([jnp.sum(y4, axis=(0, 1, 2)),
                     jnp.sum(y4 * y4, axis=(0, 1, 2))])
    return y4.reshape(N, Ho, Wo * Cout), tot, N * Ho * Wo, Ho, Wo


def bn_scale_shift(tot, gamma, beta, count):
    mean = tot[0] / count
    var = tot[1] / count - mean * mean          # biased var (training mode)
    scale = gamma * lax.rsqrt(var + EPS)
    shift = beta - mean * scale
    return scale, shift


# ---------------------------------------------------------------------------
# Parameters (deterministic, matching Mix_Kernel.__init__ shapes / init)
# ---------------------------------------------------------------------------
def init_params(key, in_channels, out_channels):
    k1, k2, k3, k4 = jax.random.split(key, 4)
    return {
        "w1_1": jax.random.normal(k1, (in_channels, 1, 5, 5), jnp.float32),
        "w1_2": jax.random.normal(k2, (in_channels, in_channels, 1, 1), jnp.float32),
        "w2_1": jax.random.normal(k3, (in_channels, 1, 5, 5), jnp.float32),
        "w2_2": jax.random.normal(k4, (out_channels, in_channels, 1, 1), jnp.float32),
        "g1": jnp.ones((in_channels,), jnp.float32),
        "b1": jnp.zeros((in_channels,), jnp.float32),
        "g2": jnp.ones((in_channels,), jnp.float32),
        "b2": jnp.zeros((in_channels,), jnp.float32),
    }


# ---------------------------------------------------------------------------
# Mix_Kernel.forward (Pallas path).  x is NCHW like the PyTorch module.
# ---------------------------------------------------------------------------
def mix_kernel_forward(x_nchw, params, o, stride):
    p = params
    N, C, H, W = x_nchw.shape
    x = jnp.transpose(x_nchw, (0, 2, 3, 1)).reshape(N, H, W * C)  # collapsed NHWC
    w1dw = jnp.transpose(p["w1_1"][:, 0], (1, 2, 0))              # (5,5,C)
    w2dw = jnp.transpose(p["w2_1"][:, 0], (1, 2, 0))              # (5,5,C)
    w1pw = jnp.transpose(p["w1_2"][:, :, 0, 0], (1, 0))           # (Cin, Cout)
    w2pw = jnp.transpose(p["w2_2"][:, :, 0, 0], (1, 0))           # (Cin, Cout)
    one = jnp.ones((C,), jnp.float32)
    zero = jnp.zeros((C,), jnp.float32)

    if o == 0:
        y1, t1, n1, _, _ = run_stage(x, one, zero, w1dw[1:4, 1:4], w1pw,
                                     pad=1, dil=1, stride=stride)
        s1, b1 = bn_scale_shift(t1, p["g1"], p["b1"], n1)
        yf, t2, n2, Ho, Wo = run_stage(y1, s1, b1, w2dw[1:4, 1:4], w2pw,
                                       pad=1, dil=1, stride=1)
        sc, sh = bn_scale_shift(t2, p["g2"], p["b2"], n2)
        Cout = int(w2pw.shape[1])
    elif o == 1:
        y1, t1, n1, _, _ = run_stage(x, one, zero, w1dw, w1pw,
                                     pad=2, dil=1, stride=stride)
        s1, b1 = bn_scale_shift(t1, p["g1"], p["b1"], n1)
        yf, t2, n2, Ho, Wo = run_stage(y1, s1, b1, w2dw, w2pw,
                                       pad=2, dil=1, stride=1)
        sc, sh = bn_scale_shift(t2, p["g2"], p["b2"], n2)
        Cout = int(w2pw.shape[1])
    elif o == 2:
        yf, t2, n2, Ho, Wo = run_stage(x, one, zero, w2dw[1:4, 1:4], w2pw,
                                       pad=2, dil=2, stride=stride)
        sc, sh = bn_scale_shift(t2, p["g2"], p["b2"], n2)
        Cout = int(w2pw.shape[1])
    elif o == 3:
        yf, t2, n2, Ho, Wo = run_stage(x, one, zero, w2dw, w2pw,
                                       pad=4, dil=2, stride=stride)
        sc, sh = bn_scale_shift(t2, p["g2"], p["b2"], n2)
        Cout = int(w2pw.shape[1])
    else:
        raise ValueError("o must be in {0,1,2,3}")

    # Final BN apply left to XLA so it fuses with the output transpose.
    out = yf.reshape(N, Ho, Wo, Cout) * sc + sh
    return jnp.transpose(out, (0, 3, 1, 2))                     # NHWC -> NCHW


# ---------------------------------------------------------------------------
# Pure-JAX reference (mirrors the PyTorch ops) for numerical verification.
# ---------------------------------------------------------------------------
def ref_forward(x, params, o, stride):
    C = params["w1_1"].shape[0]
    hi = lax.Precision.HIGHEST

    def dw(x, w, s, pad, dil):
        return lax.conv_general_dilated(
            x, w, (s, s), [(pad, pad), (pad, pad)], rhs_dilation=(dil, dil),
            feature_group_count=C, dimension_numbers=("NCHW", "OIHW", "NCHW"),
            precision=hi)

    def pw(x, w):
        return lax.conv_general_dilated(
            x, w, (1, 1), [(0, 0), (0, 0)],
            dimension_numbers=("NCHW", "OIHW", "NCHW"), precision=hi)

    def bn(x, g, b):
        mean = jnp.mean(x, axis=(0, 2, 3), keepdims=True)
        var = jnp.mean((x - mean) ** 2, axis=(0, 2, 3), keepdims=True)
        return (x - mean) * lax.rsqrt(var + EPS) * g.reshape(1, -1, 1, 1) \
            + b.reshape(1, -1, 1, 1)

    relu = lambda t: jnp.maximum(t, 0.0)
    w1_1, w1_2 = params["w1_1"], params["w1_2"]
    w2_1, w2_2 = params["w2_1"], params["w2_2"]

    if o == 0:
        x = relu(x); x = dw(x, w1_1[:, :, 1:4, 1:4], stride, 1, 1)
        x = pw(x, w1_2); x = bn(x, params["g1"], params["b1"])
        x = relu(x); x = dw(x, w2_1[:, :, 1:4, 1:4], 1, 1, 1)
        x = pw(x, w2_2); x = bn(x, params["g2"], params["b2"])
    elif o == 1:
        x = relu(x); x = dw(x, w1_1, stride, 2, 1)
        x = pw(x, w1_2); x = bn(x, params["g1"], params["b1"])
        x = relu(x); x = dw(x, w2_1, 1, 2, 1)
        x = pw(x, w2_2); x = bn(x, params["g2"], params["b2"])
    elif o == 2:
        x = relu(x); x = dw(x, w2_1[:, :, 1:4, 1:4], stride, 2, 2)
        x = pw(x, w2_2); x = bn(x, params["g2"], params["b2"])
    elif o == 3:
        x = relu(x); x = dw(x, w2_1, stride, 4, 2)
        x = pw(x, w2_2); x = bn(x, params["g2"], params["b2"])
    return x


if __name__ == "__main__":
    in_channels = 4
    out_channels = 4   # module's b2 = BatchNorm2d(in_channels) requires this
    N, H, W = 2, 16, 16

    key = jax.random.PRNGKey(0)
    kx, kp = jax.random.split(key)
    x = jax.random.normal(kx, (N, in_channels, H, W), jnp.float32)
    params = init_params(kp, in_channels, out_channels)

    fwd = jax.jit(mix_kernel_forward, static_argnums=(2, 3))
    for o, stride in [(0, 1), (1, 1), (2, 1), (3, 1), (0, 2)]:
        out = jax.block_until_ready(fwd(x, params, o, stride))
        ref = jax.block_until_ready(ref_forward(x, params, o, stride))
        assert out.shape == ref.shape, (o, stride, out.shape, ref.shape)
        err = float(jnp.max(jnp.abs(out - ref)))
        assert jnp.allclose(out, ref, rtol=2e-3, atol=2e-3), (
            f"mismatch at o={o} stride={stride}: max err {err}")

    print("KERNEL_OK")
</pallas_src>

<mosaic_0001>
module attributes {stable_mosaic.version = 11 : i64} {
  func.func @_stage_kernel(%arg0: i32, %arg1: memref<1x16x64xf32, #tpu.memory_space<vmem>>, %arg2: memref<2x64xf32, #tpu.memory_space<vmem>>, %arg3: memref<9x64xf32, #tpu.memory_space<vmem>>, %arg4: memref<8x64xf32, #tpu.memory_space<vmem>>, %arg5: memref<1x16x64xf32, #tpu.memory_space<vmem>>, %arg6: memref<1x2x64xf32, #tpu.memory_space<vmem>>, %arg7: memref<18x72xf32, #tpu.memory_space<vmem>>, %arg8: memref<16x72xf32, #tpu.memory_space<vmem>>) attributes {dimension_semantics = [#tpu.dimension_semantics<parallel>], iteration_bounds = array<i64: 2>, scalar_prefetch = 0 : i64, scratch_operands = 2 : i64, tpu.core_type = #tpu.core_type<tc>, window_params = [{transform_indices = @transform_0, window_bounds = array<i64: 1, 16, 64>}, {pipeline_mode = #tpu.pipeline_mode<synchronous>, transform_indices = @transform_1, window_bounds = array<i64: 2, 64>}, {pipeline_mode = #tpu.pipeline_mode<synchronous>, transform_indices = @transform_2, window_bounds = array<i64: 9, 64>}, {pipeline_mode = #tpu.pipeline_mode<synchronous>, transform_indices = @transform_3, window_bounds = array<i64: 8, 64>}, {transform_indices = @transform_4, window_bounds = array<i64: 1, 16, 64>}, {transform_indices = @transform_5, window_bounds = array<i64: 1, 2, 64>}]} {
    %cst = arith.constant 0.000000e+00 : f32
    %0 = vector.broadcast %cst : f32 to vector<1x72xf32>
    %c0 = arith.constant 0 : index
    %c0_0 = arith.constant 0 : index
    %1 = vector.load %arg7[%c0, %c0_0] : memref<18x72xf32, #tpu.memory_space<vmem>>, vector<1x72xf32>
    tpu.vector_store %arg7[%c0, %c0_0], %0 {strides = array<i32>} : memref<18x72xf32, #tpu.memory_space<vmem>>, vector<1x72xf32>,
    %cst_1 = arith.constant 0.000000e+00 : f32
    %2 = vector.broadcast %cst_1 : f32 to vector<1x72xf32>
    %c17 = arith.constant 17 : index
    %c0_2 = arith.constant 0 : index
    %3 = vector.load %arg7[%c17, %c0_2] : memref<18x72xf32, #tpu.memory_space<vmem>>, vector<1x72xf32>
    tpu.vector_store %arg7[%c17, %c0_2], %2 {strides = array<i32>} : memref<18x72xf32, #tpu.memory_space<vmem>>, vector<1x72xf32>,
    %cst_3 = arith.constant 0.000000e+00 : f32
    %4 = vector.broadcast %cst_3 : f32 to vector<16x4xf32>
    %c1 = arith.constant 1 : index
    %c0_4 = arith.constant 0 : index
    %5 = vector.load %arg7[%c1, %c0_4] : memref<18x72xf32, #tpu.memory_space<vmem>>, vector<16x4xf32>
    tpu.vector_store %arg7[%c1, %c0_4], %4 {strides = array<i32>} : memref<18x72xf32, #tpu.memory_space<vmem>>, vector<16x4xf32>,
    %cst_5 = arith.constant 0.000000e+00 : f32
    %6 = vector.broadcast %cst_5 : f32 to vector<16x4xf32>
    %c1_6 = arith.constant 1 : index
    %c68 = arith.constant 68 : index
    %7 = vector.load %arg7[%c1_6, %c68] : memref<18x72xf32, #tpu.memory_space<vmem>>, vector<16x4xf32>
    tpu.vector_store %arg7[%c1_6, %c68], %6 {strides = array<i32>} : memref<18x72xf32, #tpu.memory_space<vmem>>, vector<16x4xf32>,
    %c0_7 = arith.constant 0 : index
    %c0_8 = arith.constant 0 : index
    %c0_9 = arith.constant 0 : index
    %8 = vector.load %arg1[%c0_7, %c0_8, %c0_9] : memref<1x16x64xf32, #tpu.memory_space<vmem>>, vector<1x16x64xf32>
    %9 = vector.shape_cast %8 : vector<1x16x64xf32> to vector<16x64xf32>
    %c0_10 = arith.constant 0 : index
    %c0_11 = arith.constant 0 : index
    %10 = vector.load %arg2[%c0_10, %c0_11] : memref<2x64xf32, #tpu.memory_space<vmem>>, vector<1x64xf32>
    %11 = vector.broadcast %10 : vector<1x64xf32> to vector<16x64xf32>
    %12 = arith.mulf %9, %11 : vector<16x64xf32>
    %c1_12 = arith.constant 1 : index
    %c0_13 = arith.constant 0 : index
    %13 = vector.load %arg2[%c1_12, %c0_13] : memref<2x64xf32, #tpu.memory_space<vmem>>, vector<1x64xf32>
    %14 = vector.broadcast %13 : vector<1x64xf32> to vector<16x64xf32>
    %15 = arith.addf %12, %14 : vector<16x64xf32>
    %cst_14 = arith.constant 0.000000e+00 : f32
    %16 = vector.broadcast %cst_14 : f32 to vector<16x64xf32>
    %17 = arith.maximumf %15, %16 : vector<16x64xf32>
    %c1_15 = arith.constant 1 : index
    %c4 = arith.constant 4 : index
    %18 = vector.load %arg7[%c1_15, %c4] : memref<18x72xf32, #tpu.memory_space<vmem>>, vector<16x64xf32>
    tpu.vector_store %arg7[%c1_15, %c4], %17 {strides = array<i32>} : memref<18x72xf32, #tpu.memory_space<vmem>>, vector<16x64xf32>,
    %cst_16 = arith.constant 0.000000e+00 : f32
    %19 = vector.broadcast %cst_16 : f32 to vector<16x64xf32>
    %c0_17 = arith.constant 0 : index
    %c0_18 = arith.constant 0 : index
    %20 = vector.load %arg7[%c0_17, %c0_18] : memref<18x72xf32, #tpu.memory_space<vmem>>, vector<16x64xf32>
    %c0_19 = arith.constant 0 : index
    %c0_20 = arith.constant 0 : index
    %21 = vector.load %arg3[%c0_19, %c0_20] : memref<9x64xf32, #tpu.memory_space<vmem>>, vector<1x64xf32>
    %22 = vector.broadcast %21 : vector<1x64xf32> to vector<16x64xf32>
    %23 = arith.mulf %20, %22 : vector<16x64xf32>
    %24 = arith.addf %19, %23 : vector<16x64xf32>
    %c0_21 = arith.constant 0 : index
    %c4_22 = arith.constant 4 : index
    %25 = vector.load %arg7[%c0_21, %c4_22] : memref<18x72xf32, #tpu.memory_space<vmem>>, vector<16x64xf32>
    %c1_23 = arith.constant 1 : index
    %c0_24 = arith.constant 0 : index
    %26 = vector.load %arg3[%c1_23, %c0_24] : memref<9x64xf32, #tpu.memory_space<vmem>>, vector<1x64xf32>
    %27 = vector.broadcast %26 : vector<1x64xf32> to vector<16x64xf32>
    %28 = arith.mulf %25, %27 : vector<16x64xf32>
    %29 = arith.addf %24, %28 : vector<16x64xf32>
    %c0_25 = arith.constant 0 : index
    %c8 = arith.constant 8 : index
    %30 = vector.load %arg7[%c0_25, %c8] : memref<18x72xf32, #tpu.memory_space<vmem>>, vector<16x64xf32>
    %c2 = arith.constant 2 : index
    %c0_26 = arith.constant 0 : index
    %31 = vector.load %arg3[%c2, %c0_26] : memref<9x64xf32, #tpu.memory_space<vmem>>, vector<1x64xf32>
    %32 = vector.broadcast %31 : vector<1x64xf32> to vector<16x64xf32>
    %33 = arith.mulf %30, %32 : vector<16x64xf32>
    %34 = arith.addf %29, %33 : vector<16x64xf32>
    %c1_27 = arith.constant 1 : index
    %c0_28 = arith.constant 0 : index
    %35 = vector.load %arg7[%c1_27, %c0_28] : memref<18x72xf32, #tpu.memory_space<vmem>>, vector<16x64xf32>
    %c3 = arith.constant 3 : index
    %c0_29 = arith.constant 0 : index
    %36 = vector.load %arg3[%c3, %c0_29] : memref<9x64xf32, #tpu.memory_space<vmem>>, vector<1x64xf32>
    %37 = vector.broadcast %36 : vector<1x64xf32> to vector<16x64xf32>
    %38 = arith.mulf %35, %37 : vector<16x64xf32>
    %39 = arith.addf %34, %38 : vector<16x64xf32>
    %c1_30 = arith.constant 1 : index
    %c4_31 = arith.constant 4 : index
    %40 = vector.load %arg7[%c1_30, %c4_31] : memref<18x72xf32, #tpu.memory_space<vmem>>, vector<16x64xf32>
    %c4_32 = arith.constant 4 : index
    %c0_33 = arith.constant 0 : index
    %41 = vector.load %arg3[%c4_32, %c0_33] : memref<9x64xf32, #tpu.memory_space<vmem>>, vector<1x64xf32>
    %42 = vector.broadcast %41 : vector<1x64xf32> to vector<16x64xf32>
    %43 = arith.mulf %40, %42 : vector<16x64xf32>
    %44 = arith.addf %39, %43 : vector<16x64xf32>
    %c1_34 = arith.constant 1 : index
    %c8_35 = arith.constant 8 : index
    %45 = vector.load %arg7[%c1_34, %c8_35] : memref<18x72xf32, #tpu.memory_space<vmem>>, vector<16x64xf32>
    %c5 = arith.constant 5 : index
    %c0_36 = arith.constant 0 : index
    %46 = vector.load %arg3[%c5, %c0_36] : memref<9x64xf32, #tpu.memory_space<vmem>>, vector<1x64xf32>
    %47 = vector.broadcast %46 : vector<1x64xf32> to vector<16x64xf32>
    %48 = arith.mulf %45, %47 : vector<16x64xf32>
    %49 = arith.addf %44, %48 : vector<16x64xf32>
    %c2_37 = arith.constant 2 : index
    %c0_38 = arith.constant 0 : index
    %50 = vector.load %arg7[%c2_37, %c0_38] : memref<18x72xf32, #tpu.memory_space<vmem>>, vector<16x64xf32>
    %c6 = arith.constant 6 : index
    %c0_39 = arith.constant 0 : index
    %51 = vector.load %arg3[%c6, %c0_39] : memref<9x64xf32, #tpu.memory_space<vmem>>, vector<1x64xf32>
    %52 = vector.broadcast %51 : vector<1x64xf32> to vector<16x64xf32>
    %53 = arith.mulf %50, %52 : vector<16x64xf32>
    %54 = arith.addf %49, %53 : vector<16x64xf32>
    %c2_40 = arith.constant 2 : index
    %c4_41 = arith.constant 4 : index
    %55 = vector.load %arg7[%c2_40, %c4_41] : memref<18x72xf32, #tpu.memory_space<vmem>>, vector<16x64xf32>
    %c7 = arith.constant 7 : index
    %c0_42 = arith.constant 0 : index
    %56 = vector.load %arg3[%c7, %c0_42] : memref<9x64xf32, #tpu.memory_space<vmem>>, vector<1x64xf32>
    %57 = vector.broadcast %56 : vector<1x64xf32> to vector<16x64xf32>
    %58 = arith.mulf %55, %57 : vector<16x64xf32>
    %59 = arith.addf %54, %58 : vector<16x64xf32>
    %c2_43 = arith.constant 2 : index
    %c8_44 = arith.constant 8 : index
    %60 = vector.load %arg7[%c2_43, %c8_44] : memref<18x72xf32, #tpu.memory_space<vmem>>, vector<16x64xf32>
    %c8_45 = arith.constant 8 : index
    %c0_46 = arith.constant 0 : index
    %61 = vector.load %arg3[%c8_45, %c0_46] : memref<9x64xf32, #tpu.memory_space<vmem>>, vector<1x64xf32>
    %62 = vector.broadcast %61 : vector<1x64xf32> to vector<16x64xf32>
    %63 = arith.mulf %60, %62 : vector<16x64xf32>
    %64 = arith.addf %59, %63 : vector<16x64xf32>
    %cst_47 = arith.constant 0.000000e+00 : f32
    %65 = vector.broadcast %cst_47 : f32 to vector<16x4xf32>
    %c0_48 = arith.constant 0 : index
    %c0_49 = arith.constant 0 : index
    %66 = vector.load %arg8[%c0_48, %c0_49] : memref<16x72xf32, #tpu.memory_space<vmem>>, vector<16x4xf32>
    tpu.vector_store %arg8[%c0_48, %c0_49], %65 {strides = array<i32>} : memref<16x72xf32, #tpu.memory_space<vmem>>, vector<16x4xf32>,
    %c0_50 = arith.constant 0 : index
    %c4_51 = arith.constant 4 : index
    %67 = vector.load %arg8[%c0_50, %c4_51] : memref<16x72xf32, #tpu.memory_space<vmem>>, vector<16x64xf32>
    tpu.vector_store %arg8[%c0_50, %c4_51], %64 {strides = array<i32>} : memref<16x72xf32, #tpu.memory_space<vmem>>, vector<16x64xf32>,
    %cst_52 = arith.constant 0.000000e+00 : f32
    %68 = vector.broadcast %cst_52 : f32 to vector<16x4xf32>
    %c0_53 = arith.constant 0 : index
    %c68_54 = arith.constant 68 : index
    %69 = vector.load %arg8[%c0_53, %c68_54] : memref<16x72xf32, #tpu.memory_space<vmem>>, vector<16x4xf32>
    tpu.vector_store %arg8[%c0_53, %c68_54], %68 {strides = array<i32>} : memref<16x72xf32, #tpu.memory_space<vmem>>, vector<16x4xf32>,
    %cst_55 = arith.constant 0.000000e+00 : f32
    %70 = vector.broadcast %cst_55 : f32 to vector<16x64xf32>
    %c0_56 = arith.constant 0 : index
    %c4_57 = arith.constant 4 : index
    %71 = vector.load %arg8[%c0_56, %c4_57] : memref<16x72xf32, #tpu.memory_space<vmem>>, vector<16x64xf32>
    %c0_58 = arith.constant 0 : index
    %c0_59 = arith.constant 0 : index
    %72 = vector.load %arg8[%c0_58, %c0_59] : memref<16x72xf32, #tpu.memory_space<vmem>>, vector<16x64xf32>
    %c0_60 = arith.constant 0 : index
    %c0_61 = arith.constant 0 : index
    %73 = vector.load %arg4[%c0_60, %c0_61] : memref<8x64xf32, #tpu.memory_space<vmem>>, vector<1x64xf32>
    %74 = vector.broadcast %73 : vector<1x64xf32> to vector<16x64xf32>
    %75 = arith.mulf %71, %74 : vector<16x64xf32>
    %76 = arith.addf %70, %75 : vector<16x64xf32>
    %c4_62 = arith.constant 4 : index
    %c0_63 = arith.constant 0 : index
    %77 = vector.load %arg4[%c4_62, %c0_63] : memref<8x64xf32, #tpu.memory_space<vmem>>, vector<1x64xf32>
    %78 = vector.broadcast %77 : vector<1x64xf32> to vector<16x64xf32>
    %79 = arith.mulf %72, %78 : vector<16x64xf32>
    %80 = arith.addf %76, %79 : vector<16x64xf32>
    %c0_64 = arith.constant 0 : index
    %c5_65 = arith.constant 5 : index
    %81 = vector.load %arg8[%c0_64, %c5_65] : memref<16x72xf32, #tpu.memory_space<vmem>>, vector<16x64xf32>
    %c0_66 = arith.constant 0 : index
    %c1_67 = arith.constant 1 : index
    %82 = vector.load %arg8[%c0_66, %c1_67] : memref<16x72xf32, #tpu.memory_space<vmem>>, vector<16x64xf32>
    %c1_68 = arith.constant 1 : index
    %c0_69 = arith.constant 0 : index
    %83 = vector.load %arg4[%c1_68, %c0_69] : memref<8x64xf32, #tpu.memory_space<vmem>>, vector<1x64xf32>
    %84 = vector.broadcast %83 : vector<1x64xf32> to vector<16x64xf32>
    %85 = arith.mulf %81, %84 : vector<16x64xf32>
    %86 = arith.addf %80, %85 : vector<16x64xf32>
    %c5_70 = arith.constant 5 : index
    %c0_71 = arith.constant 0 : index
    %87 = vector.load %arg4[%c5_70, %c0_71] : memref<8x64xf32, #tpu.memory_space<vmem>>, vector<1x64xf32>
    %88 = vector.broadcast %87 : vector<1x64xf32> to vector<16x64xf32>
    %89 = arith.mulf %82, %88 : vector<16x64xf32>
    %90 = arith.addf %86, %89 : vector<16x64xf32>
    %c0_72 = arith.constant 0 : index
    %c6_73 = arith.constant 6 : index
    %91 = vector.load %arg8[%c0_72, %c6_73] : memref<16x72xf32, #tpu.memory_space<vmem>>, vector<16x64xf32>
    %c0_74 = arith.constant 0 : index
    %c2_75 = arith.constant 2 : index
    %92 = vector.load %arg8[%c0_74, %c2_75] : memref<16x72xf32, #tpu.memory_space<vmem>>, vector<16x64xf32>
    %c2_76 = arith.constant 2 : index
    %c0_77 = arith.constant 0 : index
    %93 = vector.load %arg4[%c2_76, %c0_77] : memref<8x64xf32, #tpu.memory_space<vmem>>, vector<1x64xf32>
    %94 = vector.broadcast %93 : vector<1x64xf32> to vector<16x64xf32>
    %95 = arith.mulf %91, %94 : vector<16x64xf32>
    %96 = arith.addf %90, %95 : vector<16x64xf32>
    %c6_78 = arith.constant 6 : index
    %c0_79 = arith.constant 0 : index
    %97 = vector.load %arg4[%c6_78, %c0_79] : memref<8x64xf32, #tpu.memory_space<vmem>>, vector<1x64xf32>
    %98 = vector.broadcast %97 : vector<1x64xf32> to vector<16x64xf32>
    %99 = arith.mulf %92, %98 : vector<16x64xf32>
    %100 = arith.addf %96, %99 : vector<16x64xf32>
    %c0_80 = arith.constant 0 : index
    %c7_81 = arith.constant 7 : index
    %101 = vector.load %arg8[%c0_80, %c7_81] : memref<16x72xf32, #tpu.memory_space<vmem>>, vector<16x64xf32>
    %c0_82 = arith.constant 0 : index
    %c3_83 = arith.constant 3 : index
    %102 = vector.load %arg8[%c0_82, %c3_83] : memref<16x72xf32, #tpu.memory_space<vmem>>, vector<16x64xf32>
    %c3_84 = arith.constant 3 : index
    %c0_85 = arith.constant 0 : index
    %103 = vector.load %arg4[%c3_84, %c0_85] : memref<8x64xf32, #tpu.memory_space<vmem>>, vector<1x64xf32>
    %104 = vector.broadcast %103 : vector<1x64xf32> to vector<16x64xf32>
    %105 = arith.mulf %101, %104 : vector<16x64xf32>
    %106 = arith.addf %100, %105 : vector<16x64xf32>
    %c7_86 = arith.constant 7 : index
    %c0_87 = arith.constant 0 : index
    %107 = vector.load %arg4[%c7_86, %c0_87] : memref<8x64xf32, #tpu.memory_space<vmem>>, vector<1x64xf32>
    %108 = vector.broadcast %107 : vector<1x64xf32> to vector<16x64xf32>
    %109 = arith.mulf %102, %108 : vector<16x64xf32>
    %110 = arith.addf %106, %109 : vector<16x64xf32>
    %c0_88 = arith.constant 0 : index
    %c0_89 = arith.constant 0 : index
    %c0_90 = arith.constant 0 : index
    %111 = vector.load %arg5[%c0_88, %c0_89, %c0_90] : memref<1x16x64xf32, #tpu.memory_space<vmem>>, vector<1x16x64xf32>
    %112 = vector.shape_cast %111 : vector<1x16x64xf32> to vector<16x64xf32>
    %113 = vector.shape_cast %110 : vector<16x64xf32> to vector<1x16x64xf32>
    tpu.vector_store %arg5[%c0_88, %c0_89, %c0_90], %113 {strides = array<i32>} : memref<1x16x64xf32, #tpu.memory_space<vmem>>, vector<1x16x64xf32>,
    %cst_91 = arith.constant dense<0.000000e+00> : vector<64xf32>
    %114 = vector.multi_reduction <add>, %110, %cst_91 [0] : vector<16x64xf32> to vector<64xf32>
    %115 = vector.shape_cast %114 : vector<64xf32> to vector<1x64xf32>
    %c0_92 = arith.constant 0 : index
    %c0_93 = arith.constant 0 : index
    %c0_94 = arith.constant 0 : index
    %116 = vector.load %arg6[%c0_92, %c0_93, %c0_94] : memref<1x2x64xf32, #tpu.memory_space<vmem>>, vector<1x1x64xf32>
    %117 = vector.shape_cast %116 : vector<1x1x64xf32> to vector<1x64xf32>
    %118 = vector.shape_cast %115 : vector<1x64xf32> to vector<1x1x64xf32>
    tpu.vector_store %arg6[%c0_92, %c0_93, %c0_94], %118 {strides = array<i32>} : memref<1x2x64xf32, #tpu.memory_space<vmem>>, vector<1x1x64xf32>,
    %119 = arith.mulf %110, %110 : vector<16x64xf32>
    %cst_95 = arith.constant dense<0.000000e+00> : vector<64xf32>
    %120 = vector.multi_reduction <add>, %119, %cst_95 [0] : vector<16x64xf32> to vector<64xf32>
    %121 = vector.shape_cast %120 : vector<64xf32> to vector<1x64xf32>
    %c0_96 = arith.constant 0 : index
    %c1_97 = arith.constant 1 : index
    %c0_98 = arith.constant 0 : index
    %122 = vector.load %arg6[%c0_96, %c1_97, %c0_98] : memref<1x2x64xf32, #tpu.memory_space<vmem>>, vector<1x1x64xf32>
    %123 = vector.shape_cast %122 : vector<1x1x64xf32> to vector<1x64xf32>
    %124 = vector.shape_cast %121 : vector<1x64xf32> to vector<1x1x64xf32>
    tpu.vector_store %arg6[%c0_96, %c1_97, %c0_98], %124 {strides = array<i32>} : memref<1x2x64xf32, #tpu.memory_space<vmem>>, vector<1x1x64xf32>,
    return
  }
  func.func @transform_0(%arg0: i32) -> (i32, i32, i32) {
    %c0_i32 = arith.constant 0 : i32
    %c0_i32_0 = arith.constant 0 : i32
    %c0_i32_1 = arith.constant 0 : i32
    return %arg0, %c0_i32, %c0_i32_0 : i32, i32, i32
  }
  func.func @transform_1(%arg0: i32) -> (i32, i32) {
    %c0_i32 = arith.constant 0 : i32
    %c0_i32_0 = arith.constant 0 : i32
    %c0_i32_1 = arith.constant 0 : i32
    return %c0_i32, %c0_i32_0 : i32, i32
  }
  func.func @transform_2(%arg0: i32) -> (i32, i32) {
    %c0_i32 = arith.constant 0 : i32
    %c0_i32_0 = arith.constant 0 : i32
    %c0_i32_1 = arith.constant 0 : i32
    return %c0_i32, %c0_i32_0 : i32, i32
  }
  func.func @transform_3(%arg0: i32) -> (i32, i32) {
    %c0_i32 = arith.constant 0 : i32
    %c0_i32_0 = arith.constant 0 : i32
    %c0_i32_1 = arith.constant 0 : i32
    return %c0_i32, %c0_i32_0 : i32, i32
  }
  func.func @transform_4(%arg0: i32) -> (i32, i32, i32) {
    %c0_i32 = arith.constant 0 : i32
    %c0_i32_0 = arith.constant 0 : i32
    %c0_i32_1 = arith.constant 0 : i32
    return %arg0, %c0_i32, %c0_i32_0 : i32, i32, i32
  }
  func.func @transform_5(%arg0: i32) -> (i32, i32, i32) {
    %c0_i32 = arith.constant 0 : i32
    %c0_i32_0 = arith.constant 0 : i32
    %c0_i32_1 = arith.constant 0 : i32
    return %arg0, %c0_i32, %c0_i32_0 : i32, i32, i32
  }
}

</mosaic_0001>

<llo_original>
// kernel: tile.34
$region0: #{tile.34}
  %s0 = inlined_call_operand.vmem [shape: f32[4,16,4], index: 0, kind: input, shape index: {}]
  %s1 = inlined_call_operand.vmem [shape: f32[4,64], index: 1, kind: output, shape index: {}]
  $region1: #{tile.34} parent=0
    #allocation0 [shape = 'u8[4096]{0}', space=vmem, size = 0x1000, scoped, tag = 'scoped mem for output reshape']
    %s2 = smov 3
    %v3 = vld [vmem:[%s0] ss:$16 sm:%s2]
    %s4 = smov 12
    %v5 = vld [vmem:[%s0] ss:$16 sm:%s4]
    %vm6 = vcmask 1043458
    %v7 = vsel %vm6, %v5, %v3
    %vm8 = vcmask 31744
    %9 = vst.msk [vmem:[#allocation0] sm:$0xf] %vm8, %v7
    %s10 = scalar_lea.vmem %s0, 15
    %s11 = smov 3
    %v12 = vld [vmem:[%s10] ss:$16 sm:%s11]
    %s13 = scalar_lea.vmem %s0, 15
    %s14 = smov 12
    %v15 = vld [vmem:[%s13] ss:$16 sm:%s14]
    %vm16 = vcmask 1043458
    %v17 = vsel %vm16, %v15, %v12
    %18 = vrot.lane.b32.xlu0 %v17, 60
    %v19 = vpop.permute.xlu0 %18
    %vm20 = vcmask 523744
    %21 = vst.msk [vmem:[#allocation0] sm:$0xf] %vm20, %v19
    %s22 = scalar_lea.vmem %s0, 14
    %s23 = smov 3
    %v24 = vld [vmem:[%s22] ss:$16 sm:%s23]
    %s25 = scalar_lea.vmem %s0, 14
    %s26 = smov 12
    %v27 = vld [vmem:[%s25] ss:$16 sm:%s26]
    %vm28 = vcmask 1043458
    %v29 = vsel %vm28, %v27, %v24
    %30 = vrot.lane.b32.xlu0 %v29, 56
    %v31 = vpop.permute.xlu0 %30
    %vm32 = vcmask 490944
    %33 = vst.msk [vmem:[#allocation0] sm:$0xf] %vm32, %v31
    %s34 = scalar_lea.vmem %s0, 13
    %s35 = smov 3
    %v36 = vld [vmem:[%s34] ss:$16 sm:%s35]
    %s37 = scalar_lea.vmem %s0, 13
    %s38 = smov 12
    %v39 = vld [vmem:[%s37] ss:$16 sm:%s38]
    %vm40 = vcmask 1043458
    %v41 = vsel %vm40, %v39, %v36
    %42 = vrot.lane.b32.xlu0 %v41, 52
    %v43 = vpop.permute.xlu0 %42
    %vm44 = vcmask 458144
    %45 = vst.msk [vmem:[#allocation0] sm:$0xf] %vm44, %v43
    %s46 = scalar_lea.vmem %s0, 12
    %s47 = smov 3
    %v48 = vld [vmem:[%s46] ss:$16 sm:%s47]
    %s49 = scalar_lea.vmem %s0, 12
    %s50 = smov 12
    %v51 = vld [vmem:[%s49] ss:$16 sm:%s50]
    %vm52 = vcmask 1043458
    %v53 = vsel %vm52, %v51, %v48
    %54 = vrot.lane.b32.xlu0 %v53, 48
    %v55 = vpop.permute.xlu0 %54
    %vm56 = vcmask 425344
    %57 = vst.msk [vmem:[#allocation0] sm:$0xf] %vm56, %v55
    %s58 = scalar_lea.vmem %s0, 11
    %s59 = smov 3
    %v60 = vld [vmem:[%s58] ss:$16 sm:%s59]
    %s61 = scalar_lea.vmem %s0, 11
    %s62 = smov 12
    %v63 = vld [vmem:[%s61] ss:$16 sm:%s62]
    %vm64 = vcmask 1043458
    %v65 = vsel %vm64, %v63, %v60
    %66 = vrot.lane.b32.xlu0 %v65, 44
    %v67 = vpop.permute.xlu0 %66
    %vm68 = vcmask 392544
    %69 = vst.msk [vmem:[#allocation0] sm:$0xf] %vm68, %v67
    %s70 = scalar_lea.vmem %s0, 10
    %s71 = smov 3
    %v72 = vld [vmem:[%s70] ss:$16 sm:%s71]
    %s73 = scalar_lea.vmem %s0, 10
    %s74 = smov 12
    %v75 = vld [vmem:[%s73] ss:$16 sm:%s74]
    %vm76 = vcmask 1043458
    %v77 = vsel %vm76, %v75, %v72
    %78 = vrot.lane.b32.xlu0 %v77, 40
    %v79 = vpop.permute.xlu0 %78
    %vm80 = vcmask 359744
    %81 = vst.msk [vmem:[#allocation0] sm:$0xf] %vm80, %v79
    %s82 = scalar_lea.vmem %s0, 9
    %s83 = smov 3
    %v84 = vld [vmem:[%s82] ss:$16 sm:%s83]
    %s85 = scalar_lea.vmem %s0, 9
    %s86 = smov 12
    %v87 = vld [vmem:[%s85] ss:$16 sm:%s86]
    %vm88 = vcmask 1043458
    %v89 = vsel %vm88, %v87, %v84
    %90 = vrot.lane.b32.xlu0 %v89, 36
    %v91 = vpop.permute.xlu0 %90
    %vm92 = vcmask 326944
    %93 = vst.msk [vmem:[#allocation0] sm:$0xf] %vm92, %v91
    %s94 = scalar_lea.vmem %s0, 8
    %s95 = smov 3
    %v96 = vld [vmem:[%s94] ss:$16 sm:%s95]
    %s97 = scalar_lea.vmem %s0, 8
    %s98 = smov 12
    %v99 = vld [vmem:[%s97] ss:$16 sm:%s98]
    %vm100 = vcmask 1043458
    %v101 = vsel %vm100, %v99, %v96
    %102 = vrot.lane.b32.xlu0 %v101, 32
    %v103 = vpop.permute.xlu0 %102
    %vm104 = vcmask 294144
    %105 = vst.msk [vmem:[#allocation0] sm:$0xf] %vm104, %v103
    %s106 = scalar_lea.vmem %s0, 7
    %s107 = smov 3
    %v108 = vld [vmem:[%s106] ss:$16 sm:%s107]
    %s109 = scalar_lea.vmem %s0, 7
    %s110 = smov 12
    %v111 = vld [vmem:[%s109] ss:$16 sm:%s110]
    %vm112 = vcmask 1043458
    %v113 = vsel %vm112, %v111, %v108
    %114 = vrot.lane.b32.xlu0 %v113, 28
    %v115 = vpop.permute.xlu0 %114
    %vm116 = vcmask 261344
    %117 = vst.msk [vmem:[#allocation0] sm:$0xf] %vm116, %v115
    %s118 = scalar_lea.vmem %s0, 6
    %s119 = smov 3
    %v120 = vld [vmem:[%s118] ss:$16 sm:%s119]
    %s121 = scalar_lea.vmem %s0, 6
    %s122 = smov 12
    %v123 = vld [vmem:[%s121] ss:$16 sm:%s122]
    %vm124 = vcmask 1043458
    %v125 = vsel %vm124, %v123, %v120
    %126 = vrot.lane.b32.xlu0 %v125, 24
    %v127 = vpop.permute.xlu0 %126
    %vm128 = vcmask 228544
    %129 = vst.msk [vmem:[#allocation0] sm:$0xf] %vm128, %v127
    %s130 = scalar_lea.vmem %s0, 5
    %s131 = smov 3
    %v132 = vld [vmem:[%s130] ss:$16 sm:%s131]
    %s133 = scalar_lea.vmem %s0, 5
    %s134 = smov 12
    %v135 = vld [vmem:[%s133] ss:$16 sm:%s134]
    %vm136 = vcmask 1043458
    %v137 = vsel %vm136, %v135, %v132
    %138 = vrot.lane.b32.xlu0 %v137, 20
    %v139 = vpop.permute.xlu0 %138
    %vm140 = vcmask 195744
    %141 = vst.msk [vmem:[#allocation0] sm:$0xf] %vm140, %v139
    %s142 = scalar_lea.vmem %s0, 4
    %s143 = smov 3
    %v144 = vld [vmem:[%s142] ss:$16 sm:%s143]
    %s145 = scalar_lea.vmem %s0, 4
    %s146 = smov 12
    %v147 = vld [vmem:[%s145] ss:$16 sm:%s146]
    %vm148 = vcmask 1043458
    %v149 = vsel %vm148, %v147, %v144
    %150 = vrot.lane.b32.xlu0 %v149, 16
    %v151 = vpop.permute.xlu0 %150
    %vm152 = vcmask 162944
    %153 = vst.msk [vmem:[#allocation0] sm:$0xf] %vm152, %v151
    %s154 = scalar_lea.vmem %s0, 3
    %s155 = smov 3
    %v156 = vld [vmem:[%s154] ss:$16 sm:%s155]
    %s157 = scalar_lea.vmem %s0, 3
    %s158 = smov 12
    %v159 = vld [vmem:[%s157] ss:$16 sm:%s158]
    %vm160 = vcmask 1043458
    %v161 = vsel %vm160, %v159, %v156
    %162 = vrot.lane.b32.xlu0 %v161, 12
    %v163 = vpop.permute.xlu0 %162
    %vm164 = vcmask 130144
    %165 = vst.msk [vmem:[#allocation0] sm:$0xf] %vm164, %v163
    %s166 = scalar_lea.vmem %s0, 2
    %s167 = smov 3
    %v168 = vld [vmem:[%s166] ss:$16 sm:%s167]
    %s169 = scalar_lea.vmem %s0, 2
    %s170 = smov 12
    %v171 = vld [vmem:[%s169] ss:$16 sm:%s170]
    %vm172 = vcmask 1043458
    %v173 = vsel %vm172, %v171, %v168
    %174 = vrot.lane.b32.xlu0 %v173, 8
    %v175 = vpop.permute.xlu0 %174
    %vm176 = vcmask 97344
    %177 = vst.msk [vmem:[#allocation0] sm:$0xf] %vm176, %v175
    %s178 = scalar_lea.vmem %s0, 1
    %s179 = smov 3
    %v180 = vld [vmem:[%s178] ss:$16 sm:%s179]
    %s181 = scalar_lea.vmem %s0, 1
    %s182 = smov 12
    %v183 = vld [vmem:[%s181] ss:$16 sm:%s182]
    %vm184 = vcmask 1043458
    %v185 = vsel %vm184, %v183, %v180
    %186 = vrot.lane.b32.xlu0 %v185, 4
    %v187 = vpop.permute.xlu0 %186
    %vm188 = vcmask 64544
    %189 = vst.msk [vmem:[#allocation0] sm:$0xf] %vm188, %v187
    %s191 = sshllo.u32 0, 4
    %v193 = vld [vmem:[#allocation0] sm:%s191]
    %s194 = sshllo.u32 0, 4
    %195 = vst [vmem:[%s1] sm:%s194] %v193

// kernel: tile.47
$region0: #{tile.47}
  #allocation0 [shape = 's32[1]{0}', space=sflag, size = 0x4, scoped, tag = 'scoped memory for tile.47']
  %s0 = inlined_call_operand.vmem [shape: f32[4], index: 0, kind: input, shape index: {}]
  %s1 = inlined_call_operand.vmem [shape: f32[16,4], index: 1, kind: output, shape index: {}]
  // Predicated region
  $region2: #{tile.47} parent=0 // pred_check
    _
  $region3: #{tile.47} parent=0 // pred_check_branch
    %3 = sbr.rel (0) target = $region5
  $region4: #{tile.47} parent=0 // pred_region
    _
  $region5: #{tile.47} parent=0 // pred_fallthru
    _
  %v4 = vld [vmem:[%s0] ss:$0 sm:$0xff]
  %5 = vst [vmem:[%s1] sm:$0xff] %v4
  %s6 = scalar_lea.vmem %s1, 8
  %7 = vst [vmem:[%s6] sm:$0xff] %v4

// kernel: tile.49
$region0: #{tile.49}
  %s0 = inlined_call_operand.vmem [shape: f32[16,4], index: 0, kind: input, shape index: {}]
  %s1 = inlined_call_operand.vmem [shape: f32[1,64], index: 1, kind: output, shape index: {}]
  $region1: #{tile.49} parent=0
    #allocation0 [shape = 'u8[4096]{0}', space=vmem, size = 0x1000, scoped, tag = 'scoped mem for output reshape']
    %v2 = vld [vmem:[%s0] sm:$0x1]
    %vm3 = vcmask 31744
    %4 = vst.msk [vmem:[#allocation0] sm:$0x1] %vm3, %v2
    %s5 = scalar_lea.vmem %s0, 15
    %v6 = vld [vmem:[%s5] sm:$0x1]
    %7 = vrot.lane.b32.xlu0 %v6, 60
    %v8 = vpop.permute.xlu0 %7
    %vm9 = vcmask 523744
    %10 = vst.msk [vmem:[#allocation0] sm:$0x1] %vm9, %v8
    %s11 = scalar_lea.vmem %s0, 14
    %v12 = vld [vmem:[%s11] sm:$0x1]
    %13 = vrot.lane.b32.xlu0 %v12, 56
    %v14 = vpop.permute.xlu0 %13
    %vm15 = vcmask 490944
    %16 = vst.msk [vmem:[#allocation0] sm:$0x1] %vm15, %v14
    %s17 = scalar_lea.vmem %s0, 13
    %v18 = vld [vmem:[%s17] sm:$0x1]
    %19 = vrot.lane.b32.xlu0 %v18, 52
    %v20 = vpop.permute.xlu0 %19
    %vm21 = vcmask 458144
    %22 = vst.msk [vmem:[#allocation0] sm:$0x1] %vm21, %v20
    %s23 = scalar_lea.vmem %s0, 12
    %v24 = vld [vmem:[%s23] sm:$0x1]
    %25 = vrot.lane.b32.xlu0 %v24, 48
    %v26 = vpop.permute.xlu0 %25
    %vm27 = vcmask 425344
    %28 = vst.msk [vmem:[#allocation0] sm:$0x1] %vm27, %v26
    %s29 = scalar_lea.vmem %s0, 11
    %v30 = vld [vmem:[%s29] sm:$0x1]
    %31 = vrot.lane.b32.xlu0 %v30, 44
    %v32 = vpop.permute.xlu0 %31
    %vm33 = vcmask 392544
    %34 = vst.msk [vmem:[#allocation0] sm:$0x1] %vm33, %v32
    %s35 = scalar_lea.vmem %s0, 10
    %v36 = vld [vmem:[%s35] sm:$0x1]
    %37 = vrot.lane.b32.xlu0 %v36, 40
    %v38 = vpop.permute.xlu0 %37
    %vm39 = vcmask 359744
    %40 = vst.msk [vmem:[#allocation0] sm:$0x1] %vm39, %v38
    %s41 = scalar_lea.vmem %s0, 9
    %v42 = vld [vmem:[%s41] sm:$0x1]
    %43 = vrot.lane.b32.xlu0 %v42, 36
    %v44 = vpop.permute.xlu0 %43
    %vm45 = vcmask 326944
    %46 = vst.msk [vmem:[#allocation0] sm:$0x1] %vm45, %v44
    %s47 = scalar_lea.vmem %s0, 8
    %v48 = vld [vmem:[%s47] sm:$0x1]
    %49 = vrot.lane.b32.xlu0 %v48, 32
    %v50 = vpop.permute.xlu0 %49
    %vm51 = vcmask 294144
    %52 = vst.msk [vmem:[#allocation0] sm:$0x1] %vm51, %v50
    %s53 = scalar_lea.vmem %s0, 7
    %v54 = vld [vmem:[%s53] sm:$0x1]
    %55 = vrot.lane.b32.xlu0 %v54, 28
    %v56 = vpop.permute.xlu0 %55
    %vm57 = vcmask 261344
    %58 = vst.msk [vmem:[#allocation0] sm:$0x1] %vm57, %v56
    %s59 = scalar_lea.vmem %s0, 6
    %v60 = vld [vmem:[%s59] sm:$0x1]
    %61 = vrot.lane.b32.xlu0 %v60, 24
    %v62 = vpop.permute.xlu0 %61
    %vm63 = vcmask 228544
    %64 = vst.msk [vmem:[#allocation0] sm:$0x1] %vm63, %v62
    %s65 = scalar_lea.vmem %s0, 5
    %v66 = vld [vmem:[%s65] sm:$0x1]
    %67 = vrot.lane.b32.xlu0 %v66, 20
    %v68 = vpop.permute.xlu0 %67
    %vm69 = vcmask 195744
    %70 = vst.msk [vmem:[#allocation0] sm:$0x1] %vm69, %v68
    %s71 = scalar_lea.vmem %s0, 4
    %v72 = vld [vmem:[%s71] sm:$0x1]
    %73 = vrot.lane.b32.xlu0 %v72, 16
    %v74 = vpop.permute.xlu0 %73
    %vm75 = vcmask 162944
    %76 = vst.msk [vmem:[#allocation0] sm:$0x1] %vm75, %v74
    %s77 = scalar_lea.vmem %s0, 3
    %v78 = vld [vmem:[%s77] sm:$0x1]
    %79 = vrot.lane.b32.xlu0 %v78, 12
    %v80 = vpop.permute.xlu0 %79
    %vm81 = vcmask 130144
    %82 = vst.msk [vmem:[#allocation0] sm:$0x1] %vm81, %v80
    %s83 = scalar_lea.vmem %s0, 2
    %v84 = vld [vmem:[%s83] sm:$0x1]
    %85 = vrot.lane.b32.xlu0 %v84, 8
    %v86 = vpop.permute.xlu0 %85
    %vm87 = vcmask 97344
    %88 = vst.msk [vmem:[#allocation0] sm:$0x1] %vm87, %v86
    %s89 = scalar_lea.vmem %s0, 1
    %v90 = vld [vmem:[%s89] sm:$0x1]
    %91 = vrot.lane.b32.xlu0 %v90, 4
    %v92 = vpop.permute.xlu0 %91
    %vm93 = vcmask 64544
    %94 = vst.msk [vmem:[#allocation0] sm:$0x1] %vm93, %v92
    %s96 = sshllo.u32 0, 1
    %v98 = vld [vmem:[#allocation0] sm:%s96]
    %s99 = sshllo.u32 0, 1
    %100 = vst [vmem:[%s1] sm:%s99] %v98

// kernel: mix_kernel_forward.2
$region0: #{mix_kernel_forward.2}
  #allocation0 [shape = 'u32[]', space=smem, size = 0x4, offset = 0x4, fixed_abs, tag = 'smem constant byte address 0x4 - core index']
  #allocation1 [shape = 'u32[144,128]{1,0:T(1,128)}', space=vmem, size = 0x12000, scoped, tag = 'internal scratch']
  #allocation2 [shape = 'f32[18,72]{1,0:T(8,128)}', space=vmem, size = 0x3000, scoped, tag = 'scratch operand']
  #allocation3 [shape = 'f32[16,72]{1,0:T(8,128)}', space=vmem, size = 0x2000, scoped, tag = 'scratch operand']
  %s0 = inlined_call_operand.vmem [shape: f32[2,16,64], index: 0, kind: input, shape index: {}]
  %s1 = inlined_call_operand.vmem [shape: f32[2,64], index: 1, kind: input, shape index: {}]
  %s2 = inlined_call_operand.vmem [shape: f32[9,64], index: 2, kind: input, shape index: {}]
  %s3 = inlined_call_operand.vmem [shape: f32[8,64], index: 3, kind: input, shape index: {}]
  %s4 = inlined_call_operand.vmem [shape: f32[2,16,64], index: 4, kind: output, shape index: {0}]
  %s5 = inlined_call_operand.vmem [shape: f32[2,2,64], index: 5, kind: output, shape index: {1}]
  %6 = xla_tuple %s4, %s5
  %s7 = sld [smem:[#allocation0]]
  $region57: #{mix_kernel_forward.2} parent=0
    _
  %s9 = ssub.s32 1, %s7
  %s10 = scalar_select 0, %s9, %s7
  loop: start=0, step=1, limit=4
  $region2: #{mix_kernel_forward.2} parent=0 // loop_pre_header
    _
  $region3: #{mix_kernel_forward.2} parent=0 // loop_header
    %s12 = sphi 0, %s16
    %p13 = scmp.ge.s32.totalorder %s12, 4
    %s22 = sphi 0, %s24
    %s25 = sphi 0, %s22
    %s26 = sphi 0, %s25
    %s42 = sphi 0, %s26
    %s46 = sphi 0, %s46
    %s48 = sphi 0, %s46
    %s49 = sphi 0, %s48
    %s63 = sphi 0, %s49
    %s67 = sphi 0, %s67
    %s69 = sphi 0, %s67
    %s70 = sphi 0, %s69
    %s84 = sphi 0, %s70
    %s88 = sphi 0, %s88
    %s90 = sphi 0, %s88
    %s91 = sphi 0, %s90
    %s105 = sphi 0, %s91
    %s111 = sphi 0, %s113
    %s114 = sphi 0, %s111
    %s115 = sphi 0, %s114
    %s131 = sphi 0, %s115
    %s137 = sphi 0, %s139
    %s140 = sphi 0, %s137
    %s141 = sphi 0, %s140
    %s157 = sphi 0, %s141
  $region4: #{mix_kernel_forward.2} parent=0 // loop_header_branch
    %15 = sbr.rel (%p13) target = $region8
  $region5: #{mix_kernel_forward.2} parent=0 // loop_body
    %s17 = ssub.s32 %s12, 1
    %s18 = ssub.s32 %s12, 2
    %s19 = sadd.s32 %s12, 1
    %s20 = ssub.s32 %s12, %s19
    %p21 = scmp.eq.s32.totalorder %s20, 0
    %s23 = sadd.s32 %s22, 1
    %s24 = scalar_select %p21, %s22, %s23
    %p27 = pneg %p21
    %p28 = scmp.eq.s32.totalorder %s12, 1
    %p29 = por %p27, %p28
    %p30 = scmp.ne.s32.totalorder %s22, %s25
    %p31 = scmp.eq.s32.totalorder %s12, 0
    %p32 = por %p30, %p31
    %p33 = scmp.ne.s32.totalorder %s22, %s25
    %p34 = scmp.eq.s32.totalorder %s17, 1
    %p35 = por %p33, %p34
    %p36 = scmp.ne.s32.totalorder %s25, %s26
    %p37 = scmp.eq.s32.totalorder %s17, 0
    %p38 = por %p36, %p37
    %p39 = scmp.ne.s32.totalorder %s25, %s26
    %p40 = scmp.eq.s32.totalorder %s18, 1
    %p41 = por %p39, %p40
    %p43 = scmp.ne.s32.totalorder %s26, %s42
    %p44 = scmp.eq.s32.totalorder %s18, 0
    %p45 = por %p43, %p44
    %s47 = sadd.s32 %s46, 1
    %p50 = scmp.eq.s32.totalorder %s12, 1
    %p51 = scmp.ne.s32.totalorder %s46, %s48
    %p52 = scmp.eq.s32.totalorder %s12, 0
    %p53 = por %p51, %p52
    %p54 = scmp.ne.s32.totalorder %s46, %s48
    %p55 = scmp.eq.s32.totalorder %s17, 1
    %p56 = por %p54, %p55
    %p57 = scmp.ne.s32.totalorder %s48, %s49
    %p58 = scmp.eq.s32.totalorder %s17, 0
    %p59 = por %p57, %p58
    %p60 = scmp.ne.s32.totalorder %s48, %s49
    %p61 = scmp.eq.s32.totalorder %s18, 1
    %p62 = por %p60, %p61
    %p64 = scmp.ne.s32.totalorder %s49, %s63
    %p65 = scmp.eq.s32.totalorder %s18, 0
    %p66 = por %p64, %p65
    %s68 = sadd.s32 %s67, 1
    %p71 = scmp.eq.s32.totalorder %s12, 1
    %p72 = scmp.ne.s32.totalorder %s67, %s69
    %p73 = scmp.eq.s32.totalorder %s12, 0
    %p74 = por %p72, %p73
    %p75 = scmp.ne.s32.totalorder %s67, %s69
    %p76 = scmp.eq.s32.totalorder %s17, 1
    %p77 = por %p75, %p76
    %p78 = scmp.ne.s32.totalorder %s69, %s70
    %p79 = scmp.eq.s32.totalorder %s17, 0
    %p80 = por %p78, %p79
    %p81 = scmp.ne.s32.totalorder %s69, %s70
    %p82 = scmp.eq.s32.totalorder %s18, 1
    %p83 = por %p81, %p82
    %p85 = scmp.ne.s32.totalorder %s70, %s84
    %p86 = scmp.eq.s32.totalorder %s18, 0
    %p87 = por %p85, %p86
    %s89 = sadd.s32 %s88, 1
    %p92 = scmp.eq.s32.totalorder %s12, 1
    %p93 = scmp.ne.s32.totalorder %s88, %s90
    %p94 = scmp.eq.s32.totalorder %s12, 0
    %p95 = por %p93, %p94
    %p96 = scmp.ne.s32.totalorder %s88, %s90
    %p97 = scmp.eq.s32.totalorder %s17, 1
    %p98 = por %p96, %p97
    %p99 = scmp.ne.s32.totalorder %s90, %s91
    %p100 = scmp.eq.s32.totalorder %s17, 0
    %p101 = por %p99, %p100
    %p102 = scmp.ne.s32.totalorder %s90, %s91
    %p103 = scmp.eq.s32.totalorder %s18, 1
    %p104 = por %p102, %p103
    %p106 = scmp.ne.s32.totalorder %s91, %s105
    %p107 = scmp.eq.s32.totalorder %s18, 0
    %p108 = por %p106, %p107
    %s109 = ssub.s32 %s12, %s19
    %p110 = scmp.eq.s32.totalorder %s109, 0
    %s112 = sadd.s32 %s111, 1
    %s113 = scalar_select %p110, %s111, %s112
    %p116 = pneg %p110
    %p117 = scmp.eq.s32.totalorder %s12, 1
    %p118 = por %p116, %p117
    %p119 = scmp.ne.s32.totalorder %s111, %s114
    %p120 = scmp.eq.s32.totalorder %s12, 0
    %p121 = por %p119, %p120
    %p122 = scmp.ne.s32.totalorder %s111, %s114
    %p123 = scmp.eq.s32.totalorder %s17, 1
    %p124 = por %p122, %p123
    %p125 = scmp.ne.s32.totalorder %s114, %s115
    %p126 = scmp.eq.s32.totalorder %s17, 0
    %p127 = por %p125, %p126
    %p128 = scmp.ne.s32.totalorder %s114, %s115
    %p129 = scmp.eq.s32.totalorder %s18, 1
    %p130 = por %p128, %p129
    %p132 = scmp.ne.s32.totalorder %s115, %s131
    %p133 = scmp.eq.s32.totalorder %s18, 0
    %p134 = por %p132, %p133
    %s135 = ssub.s32 %s12, %s19
    %p136 = scmp.eq.s32.totalorder %s135, 0
    %s138 = sadd.s32 %s137, 1
    %s139 = scalar_select %p136, %s137, %s138
    %p142 = pneg %p136
    %p143 = scmp.eq.s32.totalorder %s12, 1
    %p144 = por %p142, %p143
    %p145 = scmp.ne.s32.totalorder %s137, %s140
    %p146 = scmp.eq.s32.totalorder %s12, 0
    %p147 = por %p145, %p146
    %p148 = scmp.ne.s32.totalorder %s137, %s140
    %p149 = scmp.eq.s32.totalorder %s17, 1
    %p150 = por %p148, %p149
    %p151 = scmp.ne.s32.totalorder %s140, %s141
    %p152 = scmp.eq.s32.totalorder %s17, 0
    %p153 = por %p151, %p152
    %p154 = scmp.ne.s32.totalorder %s140, %s141
    %p155 = scmp.eq.s32.totalorder %s18, 1
    %p156 = por %p154, %p155
    %p158 = scmp.ne.s32.totalorder %s141, %s157
    %p159 = scmp.eq.s32.totalorder %s18, 0
    %p160 = por %p158, %p159
    %p161 = scmp.le.s32.totalorder 1, %s12
    %p162 = scmp.lt.s32.totalorder %s12, 3
    %p163 = pnand %p161, %p162
    %p164 = pneg %p163
    // Predicated region
    $region9: #{mix_kernel_forward.2} parent=5 // pred_check
      _
    $region10: #{mix_kernel_forward.2} parent=5 // pred_check_branch
      %166 = sbr.rel (%p163) target = $region12
    $region11: #{mix_kernel_forward.2} parent=5 // pred_region
      %s167 = ssub.s32 %s12, 1
      // Predicated region
      $region13: #{mix_kernel_forward.2} parent=11 // pred_check
        %p168 = pneg %p59
      $region14: #{mix_kernel_forward.2} parent=11 // pred_check_branch
        %170 = sbr.rel (%p168) target = $region16
      $region15: #{mix_kernel_forward.2} parent=11 // pred_region
        _
      $region16: #{mix_kernel_forward.2} parent=11 // pred_fallthru
        _
      // Predicated region
      $region17: #{mix_kernel_forward.2} parent=11 // pred_check
        %p171 = pneg %p80
      $region18: #{mix_kernel_forward.2} parent=11 // pred_check_branch
        %173 = sbr.rel (%p171) target = $region20
      $region19: #{mix_kernel_forward.2} parent=11 // pred_region
        _
      $region20: #{mix_kernel_forward.2} parent=11 // pred_fallthru
        _
      // Predicated region
      $region21: #{mix_kernel_forward.2} parent=11 // pred_check
        %p174 = pneg %p101
      $region22: #{mix_kernel_forward.2} parent=11 // pred_check_branch
        %176 = sbr.rel (%p174) target = $region24
      $region23: #{mix_kernel_forward.2} parent=11 // pred_region
        _
      $region24: #{mix_kernel_forward.2} parent=11 // pred_fallthru
        _
    $region12: #{mix_kernel_forward.2} parent=5 // pred_fallthru
      _
    %p177 = scmp.lt.s32.totalorder %s12, 2
    // Predicated region
    $region25: #{mix_kernel_forward.2} parent=5 // pred_check
      %p178 = pneg %p177
    $region26: #{mix_kernel_forward.2} parent=5 // pred_check_branch
      %180 = sbr.rel (%p178) target = $region28
    $region27: #{mix_kernel_forward.2} parent=5 // pred_region
      // Predicated region
      $region29: #{mix_kernel_forward.2} parent=27 // pred_check
        %p181 = pneg %p32
      $region30: #{mix_kernel_forward.2} parent=27 // pred_check_branch
        %183 = sbr.rel (%p181) target = $region32
      $region31: #{mix_kernel_forward.2} parent=27 // pred_region
        %p184 = scmp.lt.s32.totalorder %s12, 1
        %s185 = scalar_select %p184, %s12, 1
        %s186 = smul.addr %s185, 2
        %s187 = smul.addr %s186, 8
        %s188 = scalar_lea.vmem %s0, %s187
      $region32: #{mix_kernel_forward.2} parent=27 // pred_fallthru
        _
    $region28: #{mix_kernel_forward.2} parent=5 // pred_fallthru
      _
    %p189 = scmp.le.s32.totalorder 1, %s12
    %p190 = scmp.lt.s32.totalorder %s12, 3
    %p191 = pnand %p189, %p190
    %p192 = pneg %p191
    // Predicated region
    $region33: #{mix_kernel_forward.2} parent=5 // pred_check
      _
    $region34: #{mix_kernel_forward.2} parent=5 // pred_check_branch
      %194 = sbr.rel (%p191) target = $region36
    $region35: #{mix_kernel_forward.2} parent=5 // pred_region
      %s195 = ssub.s32 %s12, 1
      %p196 = scmp.lt.s32.totalorder %s17, 1
      %s197 = scalar_select %p196, %s17, 1
      %s198 = smul.addr %s197, 2
      %s199 = smul.addr %s198, 8
      %s200 = scalar_lea.vmem %s0, %s199
      %p201 = pneg %p38
      %p202 = pneg %p35
      %p203 = pneg %p59
      %p204 = pneg %p56
      %p205 = pneg %p80
      %p206 = pneg %p77
      %p207 = pneg %p101
      %p208 = pneg %p98
      %p209 = pneg %p127
      %p210 = pneg %p124
      %p211 = scmp.lt.s32.totalorder %s17, 1
      %s212 = scalar_select %p211, %s17, 1
      %s213 = smul.addr %s212, 2
      %s214 = smul.addr %s213, 8
      %s215 = scalar_lea.vmem %s4, %s214
      %p216 = pneg %p153
      %p217 = pneg %p150
      %p218 = scmp.lt.s32.totalorder %s17, 1
      %s219 = scalar_select %p218, %s17, 1
      %s220 = smul.addr %s219, 2
      %s221 = scalar_lea.vmem %s5, %s220
      %p222 = scmp.lt.s32.totalorder %s17, 1
      %s223 = scalar_select %p222, %s17, 1
      %s224 = smul.addr %s223, 2
      %s225 = smul.addr %s224, 8
      %s226 = scalar_lea.vmem %s0, %s225
      %p227 = scmp.lt.s32.totalorder %s17, 1
      %s228 = scalar_select %p227, %s17, 1
      %s229 = smul.addr %s228, 2
      %s230 = smul.addr %s229, 8
      %s231 = scalar_lea.vmem %s4, %s230
      %p232 = scmp.lt.s32.totalorder %s17, 1
      %s233 = scalar_select %p232, %s17, 1
      %s234 = smul.addr %s233, 2
      %s235 = scalar_lea.vmem %s5, %s234
      %vm236 = vcmask 581632
      %237 = vst.msk [vmem:[#allocation2] sm:$0x1] %vm236, 0.0
      %238 = vst.msk [vmem:[#allocation2 + $0x11] sm:$0x1] %vm236, 0.0
      %vm239 = vcmask 31744
      %240 = vst.msk [vmem:[#allocation2 + $0x1] sm:$0xff] %vm239, 0.0
      %241 = vst.msk [vmem:[#allocation2 + $0x9] sm:$0xff] %vm239, 0.0
      %vm242 = vcmask 589344
      %243 = vst.msk [vmem:[#allocation2 + $0x1] sm:$0xff] %vm242, 0.0
      %244 = vst.msk [vmem:[#allocation2 + $0x9] sm:$0xff] %vm242, 0.0
      %v245 = vld [vmem:[%s226] sm:$0xff]
      %v246 = vld [vmem:[%s226 + $0x8] sm:$0xff]
      %v247 = vld [vmem:[%s1] sm:$0x1]
      %v248 = vlaneseq
      %v249 = vshrl.u32 %v248, 7
      %v250 = vsub.s32 0, %v249
      %v251 = vrot.slane %v247, %v250
      %v252 = vmul.f32 %v245, %v251
      %v253 = vmul.f32 %v246, %v251
      %v254 = vld [vmem:[%s1 + $0x1] sm:$0x1]
      %v255 = vlaneseq
      %v256 = vshrl.u32 %v255, 7
      %v257 = vsub.s32 0, %v256
      %v258 = vrot.slane %v254, %v257
      %v259 = vadd.f32 %v252, %v258
      %v260 = vadd.f32 %v253, %v258
      %v261 = vmax.f32 %v259, 0.0
      %v262 = vmax.f32 %v260, 0.0
      %265 = vrot.lane.b32.xlu0 %v261, 4
      %v266 = vpop.permute.xlu0 %265
      %267 = vrot.lane.b32.xlu0 %v262, 4
      %v268 = vpop.permute.xlu0 %267
      %vm271 = vcmask 556064
      %272 = vst.msk [vmem:[#allocation2 + $0x1] sm:$0xff] %vm271, %v266
      %273 = vst.msk [vmem:[#allocation2 + $0x9] sm:$0xff] %vm271, %v268
      %v274 = vld [vmem:[#allocation2] sm:$0xff]
      %v275 = vld [vmem:[#allocation2 + $0x8] sm:$0xff]
      %v276 = vld [vmem:[%s2] sm:$0x1]
      %v277 = vlaneseq
      %v278 = vshrl.u32 %v277, 7
      %v279 = vsub.s32 0, %v278
      %v280 = vrot.slane %v276, %v279
      %v281 = vmul.f32 %v274, %v280
      %v282 = vmul.f32 %v275, %v280
      %v283 = vadd.f32 %v281, 0.0
      %v284 = vadd.f32 %v282, 0.0
      %v285 = vld [vmem:[%s2 + $0x1] sm:$0x1]
      %v286 = vlaneseq
      %v287 = vshrl.u32 %v286, 7
      %v288 = vsub.s32 0, %v287
      %v289 = vrot.slane %v285, %v288
      %291 = vrot.lane.b32.xlu0 %v289, 4
      %v292 = vpop.permute.xlu0 %291
      %v294 = vmul.f32 %v274, %v292
      %v295 = vmul.f32 %v275, %v292
      %298 = vrot.lane.b32.xlu0 %v294, 124
      %v299 = vpop.permute.xlu0 %298
      %300 = vrot.lane.b32.xlu0 %v295, 124
      %v301 = vpop.permute.xlu0 %300
      %v304 = vadd.f32 %v283, %v299
      %v305 = vadd.f32 %v284, %v301
      %v306 = vld [vmem:[%s2 + $0x2] sm:$0x1]
      %v307 = vlaneseq
      %v308 = vshrl.u32 %v307, 7
      %v309 = vsub.s32 0, %v308
      %v310 = vrot.slane %v306, %v309
      %312 = vrot.lane.b32.xlu0 %v310, 8
      %v313 = vpop.permute.xlu0 %312
      %v315 = vmul.f32 %v274, %v313
      %v316 = vmul.f32 %v275, %v313
      %319 = vrot.lane.b32.xlu0 %v315, 120
      %v320 = vpop.permute.xlu0 %319
      %321 = vrot.lane.b32.xlu0 %v316, 120
      %v322 = vpop.permute.xlu0 %321
      %v325 = vadd.f32 %v304, %v320
      %v326 = vadd.f32 %v305, %v322
      %v327 = vld [vmem:[#allocation2 + $0x1] sm:$0xff]
      %v328 = vld [vmem:[#allocation2 + $0x9] sm:$0xff]
      %v329 = vld [vmem:[%s2 + $0x3] sm:$0x1]
      %v330 = vlaneseq
      %v331 = vshrl.u32 %v330, 7
      %v332 = vsub.s32 0, %v331
      %v333 = vrot.slane %v329, %v332
      %v334 = vmul.f32 %v327, %v333
      %v335 = vmul.f32 %v328, %v333
      %v336 = vadd.f32 %v325, %v334
      %v337 = vadd.f32 %v326, %v335
      %v338 = vld [vmem:[%s2 + $0x4] sm:$0x1]
      %v339 = vlaneseq
      %v340 = vshrl.u32 %v339, 7
      %v341 = vsub.s32 0, %v340
      %v342 = vrot.slane %v338, %v341
      %344 = vrot.lane.b32.xlu0 %v342, 4
      %v345 = vpop.permute.xlu0 %344
      %v347 = vmul.f32 %v327, %v345
      %v348 = vmul.f32 %v328, %v345
      %351 = vrot.lane.b32.xlu0 %v347, 124
      %v352 = vpop.permute.xlu0 %351
      %353 = vrot.lane.b32.xlu0 %v348, 124
      %v354 = vpop.permute.xlu0 %353
      %v357 = vadd.f32 %v336, %v352
      %v358 = vadd.f32 %v337, %v354
      %v359 = vld [vmem:[%s2 + $0x5] sm:$0x1]
      %v360 = vlaneseq
      %v361 = vshrl.u32 %v360, 7
      %v362 = vsub.s32 0, %v361
      %v363 = vrot.slane %v359, %v362
      %365 = vrot.lane.b32.xlu0 %v363, 8
      %v366 = vpop.permute.xlu0 %365
      %v368 = vmul.f32 %v327, %v366
      %v369 = vmul.f32 %v328, %v366
      %372 = vrot.lane.b32.xlu0 %v368, 120
      %v373 = vpop.permute.xlu0 %372
      %374 = vrot.lane.b32.xlu0 %v369, 120
      %v375 = vpop.permute.xlu0 %374
      %v378 = vadd.f32 %v357, %v373
      %v379 = vadd.f32 %v358, %v375
      %v380 = vld [vmem:[#allocation2 + $0x2] sm:$0xff]
      %v381 = vld [vmem:[#allocation2 + $0xa] sm:$0xff]
      %v382 = vld [vmem:[%s2 + $0x6] sm:$0x1]
      %v383 = vlaneseq
      %v384 = vshrl.u32 %v383, 7
      %v385 = vsub.s32 0, %v384
      %v386 = vrot.slane %v382, %v385
      %v387 = vmul.f32 %v380, %v386
      %v388 = vmul.f32 %v381, %v386
      %v389 = vadd.f32 %v378, %v387
      %v390 = vadd.f32 %v379, %v388
      %v391 = vld [vmem:[%s2 + $0x7] sm:$0x1]
      %v392 = vlaneseq
      %v393 = vshrl.u32 %v392, 7
      %v394 = vsub.s32 0, %v393
      %v395 = vrot.slane %v391, %v394
      %397 = vrot.lane.b32.xlu0 %v395, 4
      %v398 = vpop.permute.xlu0 %397
      %v400 = vmul.f32 %v380, %v398
      %v401 = vmul.f32 %v381, %v398
      %404 = vrot.lane.b32.xlu0 %v400, 124
      %v405 = vpop.permute.xlu0 %404
      %406 = vrot.lane.b32.xlu0 %v401, 124
      %v407 = vpop.permute.xlu0 %406
      %v410 = vadd.f32 %v389, %v405
      %v411 = vadd.f32 %v390, %v407
      %v412 = vld [vmem:[%s2 + $0x8] sm:$0x1]
      %v413 = vlaneseq
      %v414 = vshrl.u32 %v413, 7
      %v415 = vsub.s32 0, %v414
      %v416 = vrot.slane %v412, %v415
      %418 = vrot.lane.b32.xlu0 %v416, 8
      %v419 = vpop.permute.xlu0 %418
      %v421 = vmul.f32 %v380, %v419
      %v422 = vmul.f32 %v381, %v419
      %425 = vrot.lane.b32.xlu0 %v421, 120
      %v426 = vpop.permute.xlu0 %425
      %427 = vrot.lane.b32.xlu0 %v422, 120
      %v428 = vpop.permute.xlu0 %427
      %v431 = vadd.f32 %v410, %v426
      %v432 = vadd.f32 %v411, %v428
      %433 = vst.msk [vmem:[#allocation3] sm:$0xff] %vm239, 0.0
      %434 = vst.msk [vmem:[#allocation3 + $0x8] sm:$0xff] %vm239, 0.0
      %437 = vrot.lane.b32.xlu0 %v431, 4
      %v438 = vpop.permute.xlu0 %437
      %439 = vrot.lane.b32.xlu0 %v432, 4
      %v440 = vpop.permute.xlu0 %439
      %443 = vst.msk [vmem:[#allocation3] sm:$0xff] %vm271, %v438
      %444 = vst.msk [vmem:[#allocation3 + $0x8] sm:$0xff] %vm271, %v440
      %445 = vst.msk [vmem:[#allocation3] sm:$0xff] %vm242, 0.0
      %446 = vst.msk [vmem:[#allocation3 + $0x8] sm:$0xff] %vm242, 0.0
      %v447 = vld [vmem:[#allocation3] sm:$0xff]
      %v448 = vld [vmem:[#allocation3 + $0x8] sm:$0xff]
      %v449 = vld [vmem:[%s3] sm:$0x1]
      %v450 = vlaneseq
      %v451 = vshrl.u32 %v450, 7
      %v452 = vsub.s32 0, %v451
      %v453 = vrot.slane %v449, %v452
      %455 = vrot.lane.b32.xlu0 %v453, 4
      %v456 = vpop.permute.xlu0 %455
      %v458 = vmul.f32 %v447, %v456
      %v459 = vmul.f32 %v448, %v456
      %v460 = vadd.f32 %v458, 0.0
      %v461 = vadd.f32 %v459, 0.0
      %v462 = vld [vmem:[%s3 + $0x4] sm:$0x1]
      %v463 = vlaneseq
      %v464 = vshrl.u32 %v463, 7
      %v465 = vsub.s32 0, %v464
      %v466 = vrot.slane %v462, %v465
      %v467 = vmul.f32 %v447, %v466
      %v468 = vmul.f32 %v448, %v466
      %471 = vrot.lane.b32.xlu0 %v467, 4
      %v472 = vpop.permute.xlu0 %471
      %473 = vrot.lane.b32.xlu0 %v468, 4
      %v474 = vpop.permute.xlu0 %473
      %v477 = vadd.f32 %v460, %v472
      %v478 = vadd.f32 %v461, %v474
      %v479 = vld [vmem:[%s3 + $0x1] sm:$0x1]
      %v480 = vlaneseq
      %v481 = vshrl.u32 %v480, 7
      %v482 = vsub.s32 0, %v481
      %v483 = vrot.slane %v479, %v482
      %485 = vrot.lane.b32.xlu0 %v483, 5
      %v486 = vpop.permute.xlu0 %485
      %v488 = vmul.f32 %v447, %v486
      %v489 = vmul.f32 %v448, %v486
      %492 = vrot.lane.b32.xlu0 %v488, 127
      %v493 = vpop.permute.xlu0 %492
      %494 = vrot.lane.b32.xlu0 %v489, 127
      %v495 = vpop.permute.xlu0 %494
      %v498 = vadd.f32 %v477, %v493
      %v499 = vadd.f32 %v478, %v495
      %v500 = vld [vmem:[%s3 + $0x5] sm:$0x1]
      %v501 = vlaneseq
      %v502 = vshrl.u32 %v501, 7
      %v503 = vsub.s32 0, %v502
      %v504 = vrot.slane %v500, %v503
      %506 = vrot.lane.b32.xlu0 %v504, 1
      %v507 = vpop.permute.xlu0 %506
      %v509 = vmul.f32 %v447, %v507
      %v510 = vmul.f32 %v448, %v507
      %513 = vrot.lane.b32.xlu0 %v509, 3
      %v514 = vpop.permute.xlu0 %513
      %515 = vrot.lane.b32.xlu0 %v510, 3
      %v516 = vpop.permute.xlu0 %515
      %v519 = vadd.f32 %v498, %v514
      %v520 = vadd.f32 %v499, %v516
      %v521 = vld [vmem:[%s3 + $0x2] sm:$0x1]
      %v522 = vlaneseq
      %v523 = vshrl.u32 %v522, 7
      %v524 = vsub.s32 0, %v523
      %v525 = vrot.slane %v521, %v524
      %527 = vrot.lane.b32.xlu0 %v525, 6
      %v528 = vpop.permute.xlu0 %527
      %v530 = vmul.f32 %v447, %v528
      %v531 = vmul.f32 %v448, %v528
      %534 = vrot.lane.b32.xlu0 %v530, 126
      %v535 = vpop.permute.xlu0 %534
      %536 = vrot.lane.b32.xlu0 %v531, 126
      %v537 = vpop.permute.xlu0 %536
      %v540 = vadd.f32 %v519, %v535
      %v541 = vadd.f32 %v520, %v537
      %v542 = vld [vmem:[%s3 + $0x6] sm:$0x1]
      %v543 = vlaneseq
      %v544 = vshrl.u32 %v543, 7
      %v545 = vsub.s32 0, %v544
      %v546 = vrot.slane %v542, %v545
      %548 = vrot.lane.b32.xlu0 %v546, 2
      %v549 = vpop.permute.xlu0 %548
      %v551 = vmul.f32 %v447, %v549
      %v552 = vmul.f32 %v448, %v549
      %555 = vrot.lane.b32.xlu0 %v551, 2
      %v556 = vpop.permute.xlu0 %555
      %557 = vrot.lane.b32.xlu0 %v552, 2
      %v558 = vpop.permute.xlu0 %557
      %v561 = vadd.f32 %v540, %v556
      %v562 = vadd.f32 %v541, %v558
      %v563 = vld [vmem:[%s3 + $0x3] sm:$0x1]
      %v564 = vlaneseq
      %v565 = vshrl.u32 %v564, 7
      %v566 = vsub.s32 0, %v565
      %v567 = vrot.slane %v563, %v566
      %569 = vrot.lane.b32.xlu0 %v567, 7
      %v570 = vpop.permute.xlu0 %569
      %v572 = vmul.f32 %v447, %v570
      %v573 = vmul.f32 %v448, %v570
      %576 = vrot.lane.b32.xlu0 %v572, 125
      %v577 = vpop.permute.xlu0 %576
      %578 = vrot.lane.b32.xlu0 %v573, 125
      %v579 = vpop.permute.xlu0 %578
      %v582 = vadd.f32 %v561, %v577
      %v583 = vadd.f32 %v562, %v579
      %v584 = vld [vmem:[%s3 + $0x7] sm:$0x1]
      %v585 = vlaneseq
      %v586 = vshrl.u32 %v585, 7
      %v587 = vsub.s32 0, %v586
      %v588 = vrot.slane %v584, %v587
      %590 = vrot.lane.b32.xlu0 %v588, 3
      %v591 = vpop.permute.xlu0 %590
      %v593 = vmul.f32 %v447, %v591
      %v594 = vmul.f32 %v448, %v591
      %597 = vrot.lane.b32.xlu0 %v593, 1
      %v598 = vpop.permute.xlu0 %597
      %599 = vrot.lane.b32.xlu0 %v594, 1
      %v600 = vpop.permute.xlu0 %599
      %v603 = vadd.f32 %v582, %v598
      %v604 = vadd.f32 %v583, %v600
      %607 = vrot.lane.b32.xlu0 %v603, 124
      %v608 = vpop.permute.xlu0 %607
      %609 = vrot.lane.b32.xlu0 %v604, 124
      %v610 = vpop.permute.xlu0 %609
      %vm613 = vcmask 523264
      %614 = vst.msk [vmem:[%s231] sm:$0xff] %vm613, %v608
      %615 = vst.msk [vmem:[%s231 + $0x8] sm:$0xff] %vm613, %v610
      %v616 = vsel %vm271, %v603, 0.0
      %v617 = vsel %vm271, %v604, 0.0
      %v618 = vadd.f32 %v616, %v617
      %v619 = vrot.slane %v618, 4
      %v620 = vadd.f32 %v618, %v619
      %v621 = vrot.slane %v620, 2
      %v622 = vadd.f32 %v620, %v621
      %v623 = vrot.slane %v622, 1
      %v624 = vadd.f32 %v622, %v623
      %626 = vrot.lane.b32.xlu0 %v624, 124
      %v627 = vpop.permute.xlu0 %626
      %vm629 = vcmask 516096
      %630 = vst.msk [vmem:[%s235] sm:$0x1] %vm629, %v627
      %v631 = vmul.f32 %v603, %v603
      %v632 = vmul.f32 %v604, %v604
      %v633 = vsel %vm271, %v631, 0.0
      %v634 = vsel %vm271, %v632, 0.0
      %v635 = vadd.f32 %v633, %v634
      %v636 = vrot.slane %v635, 4
      %v637 = vadd.f32 %v635, %v636
      %v638 = vrot.slane %v637, 2
      %v639 = vadd.f32 %v637, %v638
      %v640 = vrot.slane %v639, 1
      %v641 = vadd.f32 %v639, %v640
      %643 = vrot.lane.b32.xlu0 %v641, 124
      %v644 = vpop.permute.xlu0 %643
      %646 = vst.msk [vmem:[%s235 + $0x1] sm:$0x1] %vm629, %v644
      %p647 = scmp.lt.s32.totalorder %s17, 1
      %s648 = scalar_select %p647, %s17, 1
      %s649 = smul.addr %s648, 2
      %s650 = smul.addr %s649, 8
      %s651 = scalar_lea.vmem %s4, %s650
      %p652 = scmp.lt.s32.totalorder %s17, 1
      %s653 = scalar_select %p652, %s17, 1
      %s654 = smul.addr %s653, 2
      %s655 = scalar_lea.vmem %s5, %s654
      // Predicated region
      $region37: #{mix_kernel_forward.2} parent=35 // pred_check
        %p656 = pneg %p124
      $region38: #{mix_kernel_forward.2} parent=35 // pred_check_branch
        %658 = sbr.rel (%p656) target = $region40
      $region39: #{mix_kernel_forward.2} parent=35 // pred_region
        _
      $region40: #{mix_kernel_forward.2} parent=35 // pred_fallthru
        _
      // Predicated region
      $region41: #{mix_kernel_forward.2} parent=35 // pred_check
        %p659 = pneg %p150
      $region42: #{mix_kernel_forward.2} parent=35 // pred_check_branch
        %661 = sbr.rel (%p659) target = $region44
      $region43: #{mix_kernel_forward.2} parent=35 // pred_region
        _
      $region44: #{mix_kernel_forward.2} parent=35 // pred_fallthru
        _
    $region36: #{mix_kernel_forward.2} parent=5 // pred_fallthru
      _
    %p662 = scmp.le.s32.totalorder 2, %s12
    // Predicated region
    $region45: #{mix_kernel_forward.2} parent=5 // pred_check
      %p663 = pneg %p662
    $region46: #{mix_kernel_forward.2} parent=5 // pred_check_branch
      %665 = sbr.rel (%p663) target = $region48
    $region47: #{mix_kernel_forward.2} parent=5 // pred_region
      %s666 = ssub.s32 %s12, 2
      // Predicated region
      $region49: #{mix_kernel_forward.2} parent=47 // pred_check
        %p667 = pneg %p130
      $region50: #{mix_kernel_forward.2} parent=47 // pred_check_branch
        %669 = sbr.rel (%p667) target = $region52
      $region51: #{mix_kernel_forward.2} parent=47 // pred_region
        %p670 = scmp.lt.s32.totalorder %s18, 1
        %s671 = scalar_select %p670, %s18, 1
        %s672 = smul.addr %s671, 2
        %s673 = smul.addr %s672, 8
        %s674 = scalar_lea.vmem %s4, %s673
      $region52: #{mix_kernel_forward.2} parent=47 // pred_fallthru
        _
      // Predicated region
      $region53: #{mix_kernel_forward.2} parent=47 // pred_check
        %p675 = pneg %p156
      $region54: #{mix_kernel_forward.2} parent=47 // pred_check_branch
        %677 = sbr.rel (%p675) target = $region56
      $region55: #{mix_kernel_forward.2} parent=47 // pred_region
        %p678 = scmp.lt.s32.totalorder %s18, 1
        %s679 = scalar_select %p678, %s18, 1
        %s680 = smul.addr %s679, 2
        %s681 = scalar_lea.vmem %s5, %s680
      $region56: #{mix_kernel_forward.2} parent=47 // pred_fallthru
        _
    $region48: #{mix_kernel_forward.2} parent=5 // pred_fallthru
      _
  $region6: #{mix_kernel_forward.2} parent=0 // loop_footer
    %s16 = sadd.s32 1, %s12
  $region7: #{mix_kernel_forward.2} parent=0 // loop_footer_branch
    %11 = sbr.rel target = $region3
  $region8: #{mix_kernel_forward.2} parent=0 // loop_exit
    _

</llo_original>
